<compile_context>
chip_gen: v7x
topology: tpu7x:2x2x1
jax: 0.10.0
libtpu: 0.0.40
codegen_flags: <defaults>
</compile_context>

<pallas_src>
import jax
import jax.numpy as jnp
from jax.experimental import pallas as pl
from jax.experimental.pallas import tpu as pltpu

PARAMS = {"nll": 1}


def _round_up(a, m):
    return ((a + m - 1) // m) * m


def affine_coupling_kernel(x_ref, mask_a_ref, mask_b_ref,
                           w_cat_ref, b_cat_ref, o_ref):
    x = x_ref[...]                 # (tb, Dp) f32
    mask_a = mask_a_ref[...]       # (1, Dp)  broadcast over batch
    mask_b = mask_b_ref[...]       # (1, Dp)

    xb = x * mask_b                # input * mask_B  (f32, VPU)

    # Single fused GEMM:  (tb, Dp) @ (Dp, 2*Dp) -> (tb, 2*Dp), f32 accumulate.
    w = w_cat_ref[...]             # possibly bf16
    h = jnp.dot(xb.astype(w.dtype), w, preferred_element_type=jnp.float32)
    h = jnp.maximum(h + b_cat_ref[...], 0.0)   # bias + ReLU in f32

    dp = x.shape[-1]               # static, multiple of 128 -> aligned slices
    h_mul = h[:, :dp]
    h_add = h[:, dp:]

    # input * mask_A * am_mul(...) + am_add(...)   (all f32 on the VPU)
    o_ref[...] = (x * mask_a * h_mul + h_add).astype(o_ref.dtype)


def random_affine_coupling_forward(x, mask_a, mask_b, w_mul, b_mul, w_add, b_add,
                                   *, batch_tile=None, matmul_dtype=jnp.float32):
    """x: (B, D).  Masks: (D,).  Weights pre-transposed (D_in, D_out); biases (D,)."""
    B, D = x.shape
    Dp = _round_up(D, 128)                      # lane-dense feature dim

    # Batch tile: multiple of 8, small enough to pipeline, big enough to
    # amortize per-step overhead (~85% of HBM roofline around 512 rows).
    if batch_tile is None:
        if B >= 1024:
            batch_tile = 512
        elif B > 256:
            batch_tile = 128
        else:
            batch_tile = _round_up(B, 8)
    batch_tile = max(8, _round_up(batch_tile, 8))
    Bp = _round_up(B, batch_tile)

    f32 = jnp.float32

    # Zero-pad inputs.  Padding lanes/rows are inert and sliced off below.
    xp = jnp.zeros((Bp, Dp), f32).at[:B, :D].set(x.astype(f32))
    mask_a2 = jnp.zeros((1, Dp), f32).at[0, :D].set(mask_a.astype(f32))
    mask_b2 = jnp.zeros((1, Dp), f32).at[0, :D].set(mask_b.astype(f32))

    def pad_w(w):   # (D, D) -> (Dp, Dp)
        return jnp.zeros((Dp, Dp), f32).at[:D, :D].set(w.astype(f32))

    def pad_b(b):   # (D,) -> (Dp,)
        return jnp.zeros((Dp,), f32).at[:D].set(b.astype(f32))

    # Fused weight / bias:  [mul | add] along the output axis.
    w_cat = jnp.concatenate([pad_w(w_mul), pad_w(w_add)], axis=1)   # (Dp, 2*Dp)
    w_cat = w_cat.astype(matmul_dtype)
    b_cat = jnp.concatenate([pad_b(b_mul), pad_b(b_add)]).reshape(1, 2 * Dp)

    grid = (Bp // batch_tile,)
    const_idx = lambda i: (0, 0)

    out = pl.pallas_call(
        affine_coupling_kernel,
        out_shape=jax.ShapeDtypeStruct((Bp, Dp), f32),
        grid_spec=pltpu.PrefetchScalarGridSpec(
            num_scalar_prefetch=0,
            grid=grid,
            in_specs=[
                pl.BlockSpec((batch_tile, Dp), lambda i: (i, 0)),   # x tile
                pl.BlockSpec((1, Dp), const_idx),                   # mask_A
                pl.BlockSpec((1, Dp), const_idx),                   # mask_B
                pl.BlockSpec((Dp, 2 * Dp), const_idx),              # W_cat
                pl.BlockSpec((1, 2 * Dp), const_idx),               # b_cat
            ],
            out_specs=pl.BlockSpec((batch_tile, Dp), lambda i: (i, 0)),
        ),
        compiler_params=pltpu.CompilerParams(
            dimension_semantics=("parallel",)),
    )(xp, mask_a2, mask_b2, w_cat, b_cat)

    return out[:B, :D].astype(x.dtype)


def make_params(key, dim):
    """Deterministic synthetic parameters matching the torch module shapes."""
    k_perm, k_wm, k_bm, k_wa, k_ba = jax.random.split(key, 5)

    # Complementary random masks: indices = randperm(dim)[::2]
    perm = jax.random.permutation(k_perm, dim)
    indices = perm[::2]
    mask_a = jnp.zeros((dim,), jnp.float32).at[indices].set(1.0)
    mask_b = jnp.ones((dim,), jnp.float32).at[indices].set(0.0)

    # torch.nn.Linear default init: U(-1/sqrt(in), 1/sqrt(in)), weight (out, in).
    bound = 1.0 / jnp.sqrt(jnp.float32(dim))
    w_mul_t = jax.random.uniform(k_wm, (dim, dim), jnp.float32, -bound, bound)
    b_mul = jax.random.uniform(k_bm, (dim,), jnp.float32, -bound, bound)
    w_add_t = jax.random.uniform(k_wa, (dim, dim), jnp.float32, -bound, bound)
    b_add = jax.random.uniform(k_ba, (dim,), jnp.float32, -bound, bound)

    # Pre-transpose torch weight (out, in) -> (in, out) for x @ W in kernel.
    return mask_a, mask_b, w_mul_t.T, b_mul, w_add_t.T, b_add


def reference_forward(x, mask_a, mask_b, w_mul, b_mul, w_add, b_add):
    xb = x * mask_b
    h_mul = jnp.maximum(xb @ w_mul + b_mul, 0.0)
    h_add = jnp.maximum(xb @ w_add + b_add, 0.0)
    return x * mask_a * h_mul + h_add


if __name__ == "__main__":
    # --- Test 1: small shapes, f32 matmul, tight tolerance ------------------
    dim, batch = 48, 8
    k_x, k_p = jax.random.split(jax.random.PRNGKey(0))
    x = jax.random.normal(k_x, (batch, dim), jnp.float32)
    params = make_params(k_p, dim)

    out = jax.block_until_ready(random_affine_coupling_forward(x, *params))
    ref = reference_forward(x, *params)
    assert out.shape == (batch, dim)
    assert jnp.allclose(out, ref, atol=1e-5, rtol=1e-5), "f32 mismatch vs reference"

    # --- Test 2: multi-tile grid, non-128 D, bf16 matmul path ---------------
    dim2, batch2 = 60, 384
    k_x2, k_p2 = jax.random.split(jax.random.PRNGKey(1))
    x2 = jax.random.normal(k_x2, (batch2, dim2), jnp.float32)
    params2 = make_params(k_p2, dim2)

    out2 = jax.block_until_ready(
        random_affine_coupling_forward(x2, *params2, batch_tile=128,
                                       matmul_dtype=jnp.bfloat16))
    ref2 = reference_forward(x2, *params2)
    assert out2.shape == (batch2, dim2)
    assert jnp.allclose(out2, ref2, atol=5e-2, rtol=5e-2), "bf16 mismatch vs reference"

    print("KERNEL_OK")
</pallas_src>

<mosaic_0001>
module attributes {stable_mosaic.version = 11 : i64} {
  func.func @affine_coupling_kernel(%arg0: i32, %arg1: memref<8x128xf32, #tpu.memory_space<vmem>>, %arg2: memref<1x128xf32, #tpu.memory_space<vmem>>, %arg3: memref<1x128xf32, #tpu.memory_space<vmem>>, %arg4: memref<128x256xf32, #tpu.memory_space<vmem>>, %arg5: memref<1x256xf32, #tpu.memory_space<vmem>>, %arg6: memref<8x128xf32, #tpu.memory_space<vmem>>) attributes {dimension_semantics = [#tpu.dimension_semantics<parallel>], iteration_bounds = array<i64: 1>, scalar_prefetch = 0 : i64, scratch_operands = 0 : i64, tpu.core_type = #tpu.core_type<tc>, window_params = [{transform_indices = @transform_0, window_bounds = array<i64: 8, 128>}, {pipeline_mode = #tpu.pipeline_mode<synchronous>, transform_indices = @transform_1, window_bounds = array<i64: 1, 128>}, {pipeline_mode = #tpu.pipeline_mode<synchronous>, transform_indices = @transform_2, window_bounds = array<i64: 1, 128>}, {pipeline_mode = #tpu.pipeline_mode<synchronous>, transform_indices = @transform_3, window_bounds = array<i64: 128, 256>}, {pipeline_mode = #tpu.pipeline_mode<synchronous>, transform_indices = @transform_4, window_bounds = array<i64: 1, 256>}, {transform_indices = @transform_5, window_bounds = array<i64: 8, 128>}]} {
    %c0 = arith.constant 0 : index
    %c0_0 = arith.constant 0 : index
    %0 = vector.load %arg1[%c0, %c0_0] : memref<8x128xf32, #tpu.memory_space<vmem>>, vector<8x128xf32>
    %c0_1 = arith.constant 0 : index
    %c0_2 = arith.constant 0 : index
    %1 = vector.load %arg2[%c0_1, %c0_2] : memref<1x128xf32, #tpu.memory_space<vmem>>, vector<1x128xf32>
    %c0_3 = arith.constant 0 : index
    %c0_4 = arith.constant 0 : index
    %2 = vector.load %arg3[%c0_3, %c0_4] : memref<1x128xf32, #tpu.memory_space<vmem>>, vector<1x128xf32>
    %3 = vector.broadcast %2 : vector<1x128xf32> to vector<8x128xf32>
    %4 = arith.mulf %0, %3 : vector<8x128xf32>
    %c0_5 = arith.constant 0 : index
    %c0_6 = arith.constant 0 : index
    %5 = vector.load %arg4[%c0_5, %c0_6] : memref<128x256xf32, #tpu.memory_space<vmem>>, vector<128x256xf32>
    %cst = arith.constant dense<0.000000e+00> : vector<8x256xf32>
    %6 = tpu.matmul %4, %5, %cst {dimension_numbers = #tpu.dot_dimension_numbers<[1], [0], [0], [1], [0, 0, 1, 1], [], []>} : vector<8x128xf32>, vector<128x256xf32>, vector<8x256xf32> -> vector<8x256xf32>
    %c0_7 = arith.constant 0 : index
    %c0_8 = arith.constant 0 : index
    %7 = vector.load %arg5[%c0_7, %c0_8] : memref<1x256xf32, #tpu.memory_space<vmem>>, vector<1x256xf32>
    %8 = vector.broadcast %7 : vector<1x256xf32> to vector<8x256xf32>
    %9 = arith.addf %6, %8 : vector<8x256xf32>
    %cst_9 = arith.constant 0.000000e+00 : f32
    %10 = vector.broadcast %cst_9 : f32 to vector<8x256xf32>
    %11 = arith.maximumf %9, %10 : vector<8x256xf32>
    %12 = vector.extract_strided_slice %11 {offsets = [0, 0], sizes = [8, 128], strides = [1, 1]} : vector<8x256xf32> to vector<8x128xf32>
    %13 = vector.extract_strided_slice %11 {offsets = [0, 128], sizes = [8, 128], strides = [1, 1]} : vector<8x256xf32> to vector<8x128xf32>
    %14 = vector.broadcast %1 : vector<1x128xf32> to vector<8x128xf32>
    %15 = arith.mulf %0, %14 : vector<8x128xf32>
    %16 = arith.mulf %15, %12 : vector<8x128xf32>
    %17 = arith.addf %16, %13 : vector<8x128xf32>
    %c0_10 = arith.constant 0 : index
    %c0_11 = arith.constant 0 : index
    %18 = vector.load %arg6[%c0_10, %c0_11] : memref<8x128xf32, #tpu.memory_space<vmem>>, vector<8x128xf32>
    tpu.vector_store %arg6[%c0_10, %c0_11], %17 {strides = array<i32>} : memref<8x128xf32, #tpu.memory_space<vmem>>, vector<8x128xf32>,
    return
  }
  func.func @transform_0(%arg0: i32) -> (i32, i32) {
    %c0_i32 = arith.constant 0 : i32
    %c0_i32_0 = arith.constant 0 : i32
    return %arg0, %c0_i32 : i32, i32
  }
  func.func @transform_1(%arg0: i32) -> (i32, i32) {
    %c0_i32 = arith.constant 0 : i32
    %c0_i32_0 = arith.constant 0 : i32
    %c0_i32_1 = arith.constant 0 : i32
    return %c0_i32, %c0_i32_0 : i32, i32
  }
  func.func @transform_2(%arg0: i32) -> (i32, i32) {
    %c0_i32 = arith.constant 0 : i32
    %c0_i32_0 = arith.constant 0 : i32
    %c0_i32_1 = arith.constant 0 : i32
    return %c0_i32, %c0_i32_0 : i32, i32
  }
  func.func @transform_3(%arg0: i32) -> (i32, i32) {
    %c0_i32 = arith.constant 0 : i32
    %c0_i32_0 = arith.constant 0 : i32
    %c0_i32_1 = arith.constant 0 : i32
    return %c0_i32, %c0_i32_0 : i32, i32
  }
  func.func @transform_4(%arg0: i32) -> (i32, i32) {
    %c0_i32 = arith.constant 0 : i32
    %c0_i32_0 = arith.constant 0 : i32
    %c0_i32_1 = arith.constant 0 : i32
    return %c0_i32, %c0_i32_0 : i32, i32
  }
  func.func @transform_5(%arg0: i32) -> (i32, i32) {
    %c0_i32 = arith.constant 0 : i32
    %c0_i32_0 = arith.constant 0 : i32
    return %arg0, %c0_i32 : i32, i32
  }
}

</mosaic_0001>

<llo_original>
// kernel: tpu_custom_call.1
$region0: #{tpu_custom_call.1}
  #allocation0 [shape = 'u32[]', space=smem, size = 0x4, offset = 0x4, fixed_abs, tag = 'smem constant byte address 0x4 - core index']
  #allocation1 [shape = 'u32[144,128]{1,0:T(1,128)}', space=vmem, size = 0x12000, scoped, tag = 'internal scratch']
  %s0 = inlined_call_operand.hbm [shape: f32[8,128], index: 0, kind: input, shape index: {}]
  %s1 = inlined_call_operand.vmem [shape: f32[1,128], index: 1, kind: input, shape index: {}]
  %s2 = inlined_call_operand.vmem [shape: f32[1,128], index: 2, kind: input, shape index: {}]
  %s3 = inlined_call_operand.hbm [shape: f32[128,256], index: 3, kind: input, shape index: {}]
  %s4 = inlined_call_operand.vmem [shape: f32[1,256], index: 4, kind: input, shape index: {}]
  %s5 = inlined_call_operand.hbm [shape: f32[8,128], index: 5, kind: output, shape index: {}]
  %s6 = sld [smem:[#allocation0]]
  $region38: #{tpu_custom_call.1} parent=0
    _
  %s8 = ssub.s32 1, %s6
  %s9 = scalar_select 0, %s8, %s6
  $region1: #{tpu_custom_call.1} parent=0
    #allocation2 [shape = 'u8[4096]{0}', space=vmem, size = 0x1000, scoped, tag = 'input window, operand 0, single buffered']
    #allocation3 [shape = 's32[1]{0}', space=sflag, size = 0x4, scoped, tag = 'scoped memory for tpu_custom_call.1']
    #allocation4 [shape = 's32[1]{0}', space=sflag, size = 0x4, scoped, tag = 'scoped memory for tpu_custom_call.1']
    #allocation5 [shape = 'u8[131072]{0}', space=vmem, size = 0x20000, scoped, tag = 'input window, operand 3, single buffered']
    #allocation6 [shape = 's32[1]{0}', space=sflag, size = 0x4, scoped, tag = 'scoped memory for tpu_custom_call.1']
    #allocation7 [shape = 'u8[4096]{0}', space=vmem, size = 0x1000, scoped, tag = 'output window, operand 0, single buffered']
    %10 = vsyncpa [#allocation3], 0
    %11 = vsyncpa [#allocation6], 0
    %12 = vsyncpa [#allocation4], 0
    // Predicated region
    $region2: #{tpu_custom_call.1} parent=1 // pred_check
      _
    $region3: #{tpu_custom_call.1} parent=1 // pred_check_branch
      %14 = sbr.rel (0) target = $region5
    $region4: #{tpu_custom_call.1} parent=1 // pred_region
      %s16 = ssub.s32 128, 128
      %17 = vsyncadd [#allocation3], %s16
      %s19 = sshll.u32 [#allocation2], 4
      %s20 = int_to_ptr.vmem [resolvable:$true] %s19
      %22 = dma.hbm_to_vmem [thread:$0]  %s0, 128, %s20, [#allocation3]
    $region5: #{tpu_custom_call.1} parent=1 // pred_fallthru
      _
    // Predicated region
    $region6: #{tpu_custom_call.1} parent=1 // pred_check
      _
    $region7: #{tpu_custom_call.1} parent=1 // pred_check_branch
      %24 = sbr.rel (0) target = $region9
    $region8: #{tpu_custom_call.1} parent=1 // pred_region
      _
    $region9: #{tpu_custom_call.1} parent=1 // pred_fallthru
      _
    // Predicated region
    $region10: #{tpu_custom_call.1} parent=1 // pred_check
      _
    $region11: #{tpu_custom_call.1} parent=1 // pred_check_branch
      %26 = sbr.rel (0) target = $region13
    $region12: #{tpu_custom_call.1} parent=1 // pred_region
      _
    $region13: #{tpu_custom_call.1} parent=1 // pred_fallthru
      _
    // Predicated region
    $region14: #{tpu_custom_call.1} parent=1 // pred_check
      _
    $region15: #{tpu_custom_call.1} parent=1 // pred_check_branch
      %28 = sbr.rel (0) target = $region17
    $region16: #{tpu_custom_call.1} parent=1 // pred_region
      %s30 = ssub.s32 4096, 4096
      %31 = vsyncadd [#allocation6], %s30
      %s32 = sshll.u32 [#allocation5], 4
      %s33 = int_to_ptr.vmem [resolvable:$true] %s32
      %38 = dma.hbm_to_vmem [thread:$0]  %s3, 4096, %s33, [#allocation6], 256, 256, 16
    $region17: #{tpu_custom_call.1} parent=1 // pred_fallthru
      _
    // Predicated region
    $region18: #{tpu_custom_call.1} parent=1 // pred_check
      _
    $region19: #{tpu_custom_call.1} parent=1 // pred_check_branch
      %40 = sbr.rel (0) target = $region21
    $region20: #{tpu_custom_call.1} parent=1 // pred_region
      _
    $region21: #{tpu_custom_call.1} parent=1 // pred_fallthru
      _
    // Predicated region
    $region22: #{tpu_custom_call.1} parent=1 // pred_check
      _
    $region23: #{tpu_custom_call.1} parent=1 // pred_check_branch
      %42 = sbr.rel (0) target = $region25
    $region24: #{tpu_custom_call.1} parent=1 // pred_region
      %43 = dma.done [#allocation3], 128
    $region25: #{tpu_custom_call.1} parent=1 // pred_fallthru
      _
    // Predicated region
    $region26: #{tpu_custom_call.1} parent=1 // pred_check
      _
    $region27: #{tpu_custom_call.1} parent=1 // pred_check_branch
      %45 = sbr.rel (0) target = $region29
    $region28: #{tpu_custom_call.1} parent=1 // pred_region
      %46 = dma.done [#allocation6], 4096
    $region29: #{tpu_custom_call.1} parent=1 // pred_fallthru
      _
    %v47 = vld [vmem:[#allocation2] sm:$0xff]
    %v48 = vld [vmem:[%s1] sm:$0x1]
    %v49 = vld [vmem:[%s2] sm:$0x1]
    %v51 = vlaneseq
    %v52 = vshrl.u32 %v51, 7
    %v53 = vsub.s32 0, %v52
    %v54 = vrot.slane %v49, %v53
    %v56 = vmul.f32 %v47, %v54
    %v57 = vld [vmem:[#allocation5] sm:$0xff]
    %v58 = vld [vmem:[#allocation5 + $0x8] sm:$0xff]
    %v59 = vld [vmem:[#allocation5 + $0x10] sm:$0xff]
    %v60 = vld [vmem:[#allocation5 + $0x18] sm:$0xff]
    %v61 = vld [vmem:[#allocation5 + $0x20] sm:$0xff]
    %v62 = vld [vmem:[#allocation5 + $0x28] sm:$0xff]
    %v63 = vld [vmem:[#allocation5 + $0x30] sm:$0xff]
    %v64 = vld [vmem:[#allocation5 + $0x38] sm:$0xff]
    %v65 = vld [vmem:[#allocation5 + $0x40] sm:$0xff]
    %v66 = vld [vmem:[#allocation5 + $0x48] sm:$0xff]
    %v67 = vld [vmem:[#allocation5 + $0x50] sm:$0xff]
    %v68 = vld [vmem:[#allocation5 + $0x58] sm:$0xff]
    %v69 = vld [vmem:[#allocation5 + $0x60] sm:$0xff]
    %v70 = vld [vmem:[#allocation5 + $0x68] sm:$0xff]
    %v71 = vld [vmem:[#allocation5 + $0x70] sm:$0xff]
    %v72 = vld [vmem:[#allocation5 + $0x78] sm:$0xff]
    %v73 = vld [vmem:[#allocation5 + $0x80] sm:$0xff]
    %v74 = vld [vmem:[#allocation5 + $0x88] sm:$0xff]
    %v75 = vld [vmem:[#allocation5 + $0x90] sm:$0xff]
    %v76 = vld [vmem:[#allocation5 + $0x98] sm:$0xff]
    %v77 = vld [vmem:[#allocation5 + $0xa0] sm:$0xff]
    %v78 = vld [vmem:[#allocation5 + $0xa8] sm:$0xff]
    %v79 = vld [vmem:[#allocation5 + $0xb0] sm:$0xff]
    %v80 = vld [vmem:[#allocation5 + $0xb8] sm:$0xff]
    %v81 = vld [vmem:[#allocation5 + $0xc0] sm:$0xff]
    %v82 = vld [vmem:[#allocation5 + $0xc8] sm:$0xff]
    %v83 = vld [vmem:[#allocation5 + $0xd0] sm:$0xff]
    %v84 = vld [vmem:[#allocation5 + $0xd8] sm:$0xff]
    %v85 = vld [vmem:[#allocation5 + $0xe0] sm:$0xff]
    %v86 = vld [vmem:[#allocation5 + $0xe8] sm:$0xff]
    %v87 = vld [vmem:[#allocation5 + $0xf0] sm:$0xff]
    %v88 = vld [vmem:[#allocation5 + $0xf8] sm:$0xff]
    %v89 = vld [vmem:[%s4] sm:$0x3]
    %v91 = vlaneseq
    %v92 = vshrl.u32 %v91, 7
    %v93 = vsub.s32 0, %v92
    %v94 = vrot.slane %v89, %v93
    %v95 = vlaneseq
    %v96 = vshrl.u32 %v95, 7
    %v97 = vsub.s32 1, %v96
    %v98 = vrot.slane %v89, %v97
    %101 = vmatprep.subr.mxu0 %v58
    %102 = vmatpush1.msra.mxu0 %v57
    %103 = vmatprep.subr.mxu0 %v60
    %104 = vmatpush1.msra.mxu0 %v59
    %105 = vmatprep.subr.mxu0 %v62
    %106 = vmatpush1.msra.mxu0 %v61
    %107 = vmatprep.subr.mxu0 %v64
    %108 = vmatpush1.msra.mxu0 %v63
    %109 = vmatprep.subr.mxu0 %v66
    %110 = vmatpush1.msra.mxu0 %v65
    %111 = vmatprep.subr.mxu0 %v68
    %112 = vmatpush1.msra.mxu0 %v67
    %113 = vmatprep.subr.mxu0 %v70
    %114 = vmatpush1.msra.mxu0 %v69
    %115 = vmatprep.subr.mxu0 %v72
    %116 = vmatpush1.msra.mxu0 %v71
    %117 = vmatprep.subr.mxu0 %v74
    %118 = vmatpush1.msra.mxu0 %v73
    %119 = vmatprep.subr.mxu0 %v76
    %120 = vmatpush1.msra.mxu0 %v75
    %121 = vmatprep.subr.mxu0 %v78
    %122 = vmatpush1.msra.mxu0 %v77
    %123 = vmatprep.subr.mxu0 %v80
    %124 = vmatpush1.msra.mxu0 %v79
    %125 = vmatprep.subr.mxu0 %v82
    %126 = vmatpush1.msra.mxu0 %v81
    %127 = vmatprep.subr.mxu0 %v84
    %128 = vmatpush1.msra.mxu0 %v83
    %129 = vmatprep.subr.mxu0 %v86
    %130 = vmatpush1.msra.mxu0 %v85
    %131 = vmatprep.subr.mxu0 %v88
    %132 = vmatpush1.msra.mxu0 %v87
    %133 = vmatprep.subr.mxu0 0.0
    %134 = vmatpush1.msra.mxu0 0.0
    %135 = vmatprep.subr.mxu0 0.0
    %136 = vmatpush1.msra.mxu0 0.0
    %137 = vmatprep.subr.mxu0 0.0
    %138 = vmatpush1.msra.mxu0 0.0
    %139 = vmatprep.subr.mxu0 0.0
    %140 = vmatpush1.msra.mxu0 0.0
    %141 = vmatprep.subr.mxu0 0.0
    %142 = vmatpush1.msra.mxu0 0.0
    %143 = vmatprep.subr.mxu0 0.0
    %144 = vmatpush1.msra.mxu0 0.0
    %145 = vmatprep.subr.mxu0 0.0
    %146 = vmatpush1.msra.mxu0 0.0
    %147 = vmatprep.subr.mxu0 0.0
    %148 = vmatpush1.msra.mxu0 0.0
    %149 = vmatprep.subr.mxu0 0.0
    %150 = vmatpush1.msra.mxu0 0.0
    %151 = vmatprep.subr.mxu0 0.0
    %152 = vmatpush1.msra.mxu0 0.0
    %153 = vmatprep.subr.mxu0 0.0
    %154 = vmatpush1.msra.mxu0 0.0
    %155 = vmatprep.subr.mxu0 0.0
    %156 = vmatpush1.msra.mxu0 0.0
    %157 = vmatprep.subr.mxu0 0.0
    %158 = vmatpush1.msra.mxu0 0.0
    %159 = vmatprep.subr.mxu0 0.0
    %160 = vmatpush1.msra.mxu0 0.0
    %161 = vmatprep.subr.mxu0 0.0
    %162 = vmatpush1.msra.mxu0 0.0
    %163 = vmatprep.subr.mxu0 0.0
    %164 = vmatpush1.msra.mxu0 0.0
    %165 = vmatprep.mubr.f32.mxu0 0.0
    %166 = vmatmul.mubr.f32.gmra.mrb[0].mxu0 %v56
    %v167 = vpop.f32.mrb[0].mxu0
    %v168 = vadd.f32 %v94, %v167
    %v169 = vpop.f32.mrb[0].mxu0
    %v170 = vadd.f32 %v98, %v169
    %171 = vdwg.mxu0
    %v172 = vmax.f32 %v168, 0.0
    %v173 = vmax.f32 %v170, 0.0
    %v175 = vlaneseq
    %v176 = vshrl.u32 %v175, 7
    %v177 = vsub.s32 0, %v176
    %v178 = vrot.slane %v48, %v177
    %v180 = vmul.f32 %v47, %v178
    %v181 = vmul.f32 %v180, %v172
    %v182 = vadd.f32 %v181, %v173
    %183 = vst [vmem:[#allocation7] sm:$0xff] %v182
    // Predicated region
    $region30: #{tpu_custom_call.1} parent=1 // pred_check
      _
    $region31: #{tpu_custom_call.1} parent=1 // pred_check_branch
      %185 = sbr.rel (0) target = $region33
    $region32: #{tpu_custom_call.1} parent=1 // pred_region
      %s187 = ssub.s32 128, 128
      %188 = vsyncadd [#allocation4], %s187
      %s190 = sshll.u32 [#allocation7], 4
      %s191 = int_to_ptr.vmem [resolvable:$true] %s190
      %193 = dma.vmem_to_hbm [thread:$0]  %s191, 128, %s5, [#allocation4]
    $region33: #{tpu_custom_call.1} parent=1 // pred_fallthru
      _
    // Predicated region
    $region34: #{tpu_custom_call.1} parent=1 // pred_check
      _
    $region35: #{tpu_custom_call.1} parent=1 // pred_check_branch
      %195 = sbr.rel (0) target = $region37
    $region36: #{tpu_custom_call.1} parent=1 // pred_region
      %196 = dma.done [#allocation4], 128
    $region37: #{tpu_custom_call.1} parent=1 // pred_fallthru
      _
    %197 = vsyncpa [#allocation3], 1
    %198 = vsyncpa [#allocation6], 1
    %199 = vsyncpa [#allocation4], 1

</llo_original>
